<compile_context>
chip_gen: v5e
topology: v5e:2x2
jax: 0.10.0
libtpu: 0.0.40
codegen_flags: <defaults>
</compile_context>

<pallas_src>
import jax
import jax.numpy as jnp
from jax.experimental import pallas as pl
from jax.experimental.pallas import tpu as pltpu


def _block_kernel(p_ref, w_ref, b_ref, o_ref):
    # p_ref: (9*Cin, L)      im2col patches, L = N*H*W on lanes
    # w_ref: (2*Cout, 9*Cin) [main 3x3 (BN1-scaled) ; skip 1x1 @ centre tap (BN2-scaled)]
    # b_ref: (2*Cout, 1)     folded BN biases [b1 ; b2]
    # o_ref: (Cout, L)
    cout = o_ref.shape[0]

    # Single fat MXU push: M = 2*Cout, K = 9*Cin, N = L.
    res = jnp.dot(w_ref[...], p_ref[...], preferred_element_type=jnp.float32)
    res = res + b_ref[...]                       # folded BatchNorm biases

    main = jnp.maximum(res[:cout, :], 0.0)       # ReLU(BN1(conv3x3(x)))
    skip = res[cout:, :]                         # BN2(conv1x1(x))
    o_ref[...] = jnp.maximum(main + skip, 0.0).astype(o_ref.dtype)


def block_forward(x_nchw, params):
    """Forward pass of `Block` (stride=1, Cin != Cout -> conv skip path)."""
    (w3_oihw, w1_oihw,
     g1, be1, m1, v1,
     g2, be2, m2, v2) = params
    eps = 1e-5

    N, Cin, H, W = x_nchw.shape
    Cout = w3_oihw.shape[0]
    L = N * H * W
    K = 9 * Cin

    # ---- fold BatchNorm (inference) into per-channel scale/bias -------------
    s1 = g1 / jnp.sqrt(v1 + eps)
    b1 = be1 - m1 * s1
    s2 = g2 / jnp.sqrt(v2 + eps)
    b2 = be2 - m2 * s2

    # ---- build the fused weight: BN scales folded into conv weights ---------
    # 3x3 weights, tap-major columns: W_main[o, (dy*3+dx)*Cin + c] = w3[o,c,dy,dx]*s1[o]
    w_main = jnp.transpose(w3_oihw, (0, 2, 3, 1)).reshape(Cout, K) * s1[:, None]
    # 1x1 skip weights live only in the centre-tap (dy=dx=1) columns.
    w_skip = jnp.zeros((Cout, K), jnp.float32)
    w_skip = w_skip.at[:, 4 * Cin:5 * Cin].set(w1_oihw[:, :, 0, 0] * s2[:, None])
    w = jnp.concatenate([w_main, w_skip], axis=0)               # (2*Cout, 9*Cin)
    b = jnp.concatenate([b1, b2], axis=0).reshape(2 * Cout, 1)  # (2*Cout, 1)

    # ---- im2col: 9 shifted views of the zero-padded input (layout plumbing) -
    x_pad = jnp.pad(x_nchw, ((0, 0), (0, 0), (1, 1), (1, 1)))   # (N, Cin, H+2, W+2)
    taps = [x_pad[:, :, dy:dy + H, dx:dx + W]                   # each (N, Cin, H, W)
            for dy in range(3) for dx in range(3)]
    patches = jnp.stack(taps, axis=0)                           # (9, N, Cin, H, W)
    patches = patches.transpose(0, 2, 1, 3, 4).reshape(K, L)    # (9*Cin, N*H*W)

    out = pl.pallas_call(
        _block_kernel,
        out_shape=jax.ShapeDtypeStruct((Cout, L), jnp.float32),
        grid=(1,),
        in_specs=[
            pl.BlockSpec((K, L), lambda i: (0, 0)),
            pl.BlockSpec((2 * Cout, K), lambda i: (0, 0)),
            pl.BlockSpec((2 * Cout, 1), lambda i: (0, 0)),
        ],
        out_specs=pl.BlockSpec((Cout, L), lambda i: (0, 0)),
        compiler_params=pltpu.CompilerParams(
            dimension_semantics=("arbitrary",)),
    )(patches, w, b)

    # (Cout, N*H*W) -> (N, Cout, H, W): matches PyTorch NCHW output layout.
    return jnp.transpose(out.reshape(Cout, N, H, W), (1, 0, 2, 3))


def _reference_forward(x_nchw, params):
    """Pure-JAX reference (lax conv) for correctness checking."""
    (w3, w1, g1, be1, m1, v1, g2, be2, m2, v2) = params
    eps = 1e-5
    dn = jax.lax.conv_dimension_numbers(x_nchw.shape, w3.shape,
                                        ("NCHW", "OIHW", "NCHW"))
    main = jax.lax.conv_general_dilated(x_nchw, w3, (1, 1), ((1, 1), (1, 1)),
                                        dimension_numbers=dn)
    main = (main - m1[None, :, None, None]) / jnp.sqrt(v1 + eps)[None, :, None, None]
    main = main * g1[None, :, None, None] + be1[None, :, None, None]
    main = jnp.maximum(main, 0.0)

    skip = jax.lax.conv_general_dilated(x_nchw, w1, (1, 1), ((0, 0), (0, 0)),
                                        dimension_numbers=dn)
    skip = (skip - m2[None, :, None, None]) / jnp.sqrt(v2 + eps)[None, :, None, None]
    skip = skip * g2[None, :, None, None] + be2[None, :, None, None]
    return jnp.maximum(main + skip, 0.0)


if __name__ == "__main__":
    # Small deterministic config: Block(in_channels=4, out_channels=8, stride=1)
    N, Cin, H, W = 2, 4, 16, 16
    Cout = 8

    key = jax.random.PRNGKey(0)
    keys = jax.random.split(key, 8)

    x = jax.random.normal(keys[0], (N, Cin, H, W), jnp.float32)        # NCHW input

    w3 = jax.random.normal(keys[1], (Cout, Cin, 3, 3), jnp.float32) * 0.1
    w1 = jax.random.normal(keys[2], (Cout, Cin, 1, 1), jnp.float32) * 0.1
    # BatchNorm params / running stats (inference mode).
    g1 = 1.0 + 0.1 * jax.random.normal(keys[3], (Cout,), jnp.float32)
    be1 = 0.1 * jax.random.normal(keys[4], (Cout,), jnp.float32)
    m1 = 0.05 * jax.random.normal(keys[5], (Cout,), jnp.float32)
    v1 = 1.0 + 0.1 * jax.random.uniform(keys[6], (Cout,), jnp.float32)
    g2 = jnp.ones((Cout,), jnp.float32)
    be2 = jnp.zeros((Cout,), jnp.float32)
    m2 = 0.05 * jax.random.normal(keys[7], (Cout,), jnp.float32)
    v2 = jnp.ones((Cout,), jnp.float32)

    params = (w3, w1, g1, be1, m1, v1, g2, be2, m2, v2)

    y = block_forward(x, params)
    y = jax.block_until_ready(y)

    y_ref = _reference_forward(x, params)
    assert y.shape == (N, Cout, H, W)
    assert jnp.allclose(y, y_ref, atol=1e-4, rtol=1e-4), "mismatch vs reference"

    print("KERNEL_OK")
</pallas_src>

<mosaic_0001>
module attributes {stable_mosaic.version = 11 : i64} {
  func.func @_block_kernel(%arg0: i32, %arg1: memref<36x512xf32, #tpu.memory_space<vmem>>, %arg2: memref<16x36xf32, #tpu.memory_space<vmem>>, %arg3: memref<16x1xf32, #tpu.memory_space<vmem>>, %arg4: memref<8x512xf32, #tpu.memory_space<vmem>>) attributes {dimension_semantics = [#tpu.dimension_semantics<arbitrary>], iteration_bounds = array<i64: 1>, scalar_prefetch = 0 : i64, scratch_operands = 0 : i64, tpu.core_type = #tpu.core_type<tc>, window_params = [{pipeline_mode = #tpu.pipeline_mode<synchronous>, transform_indices = @transform_0, window_bounds = array<i64: 36, 512>}, {pipeline_mode = #tpu.pipeline_mode<synchronous>, transform_indices = @transform_1, window_bounds = array<i64: 16, 36>}, {pipeline_mode = #tpu.pipeline_mode<synchronous>, transform_indices = @transform_2, window_bounds = array<i64: 16, 1>}, {pipeline_mode = #tpu.pipeline_mode<synchronous>, transform_indices = @transform_3, window_bounds = array<i64: 8, 512>}]} {
    %c0 = arith.constant 0 : index
    %c0_0 = arith.constant 0 : index
    %0 = vector.load %arg2[%c0, %c0_0] : memref<16x36xf32, #tpu.memory_space<vmem>>, vector<16x36xf32>
    %c0_1 = arith.constant 0 : index
    %c0_2 = arith.constant 0 : index
    %1 = vector.load %arg1[%c0_1, %c0_2] : memref<36x512xf32, #tpu.memory_space<vmem>>, vector<36x512xf32>
    %cst = arith.constant dense<0.000000e+00> : vector<16x512xf32>
    %2 = tpu.matmul %0, %1, %cst {dimension_numbers = #tpu.dot_dimension_numbers<[1], [0], [0], [1], [0, 0, 1, 1], [], []>} : vector<16x36xf32>, vector<36x512xf32>, vector<16x512xf32> -> vector<16x512xf32>
    %c0_3 = arith.constant 0 : index
    %c0_4 = arith.constant 0 : index
    %3 = vector.load %arg3[%c0_3, %c0_4] : memref<16x1xf32, #tpu.memory_space<vmem>>, vector<16x1xf32>
    %4 = vector.broadcast %3 : vector<16x1xf32> to vector<16x512xf32>
    %5 = arith.addf %2, %4 : vector<16x512xf32>
    %6 = vector.extract_strided_slice %5 {offsets = [0, 0], sizes = [8, 512], strides = [1, 1]} : vector<16x512xf32> to vector<8x512xf32>
    %cst_5 = arith.constant 0.000000e+00 : f32
    %7 = vector.broadcast %cst_5 : f32 to vector<8x512xf32>
    %8 = arith.maximumf %6, %7 : vector<8x512xf32>
    %9 = vector.extract_strided_slice %5 {offsets = [8, 0], sizes = [8, 512], strides = [1, 1]} : vector<16x512xf32> to vector<8x512xf32>
    %10 = arith.addf %8, %9 : vector<8x512xf32>
    %cst_6 = arith.constant 0.000000e+00 : f32
    %11 = vector.broadcast %cst_6 : f32 to vector<8x512xf32>
    %12 = arith.maximumf %10, %11 : vector<8x512xf32>
    %c0_7 = arith.constant 0 : index
    %c0_8 = arith.constant 0 : index
    %13 = vector.load %arg4[%c0_7, %c0_8] : memref<8x512xf32, #tpu.memory_space<vmem>>, vector<8x512xf32>
    tpu.vector_store %arg4[%c0_7, %c0_8], %12 {strides = array<i32>} : memref<8x512xf32, #tpu.memory_space<vmem>>, vector<8x512xf32>,
    return
  }
  func.func @transform_0(%arg0: i32) -> (i32, i32) {
    %c0_i32 = arith.constant 0 : i32
    %c0_i32_0 = arith.constant 0 : i32
    %c0_i32_1 = arith.constant 0 : i32
    return %c0_i32, %c0_i32_0 : i32, i32
  }
  func.func @transform_1(%arg0: i32) -> (i32, i32) {
    %c0_i32 = arith.constant 0 : i32
    %c0_i32_0 = arith.constant 0 : i32
    %c0_i32_1 = arith.constant 0 : i32
    return %c0_i32, %c0_i32_0 : i32, i32
  }
  func.func @transform_2(%arg0: i32) -> (i32, i32) {
    %c0_i32 = arith.constant 0 : i32
    %c0_i32_0 = arith.constant 0 : i32
    %c0_i32_1 = arith.constant 0 : i32
    return %c0_i32, %c0_i32_0 : i32, i32
  }
  func.func @transform_3(%arg0: i32) -> (i32, i32) {
    %c0_i32 = arith.constant 0 : i32
    %c0_i32_0 = arith.constant 0 : i32
    %c0_i32_1 = arith.constant 0 : i32
    return %c0_i32, %c0_i32_0 : i32, i32
  }
}

</mosaic_0001>

<llo_original>
// kernel: tpu_custom_call.1
$region0: #{tpu_custom_call.1}
  #allocation0 [shape = 'u32[]', space=smem, size = 0x4, offset = 0x4, fixed_abs, tag = 'smem constant byte address 0x4 - core index']
  #allocation1 [shape = 'u32[72,128]{1,0:T(1,128)}', space=vmem, size = 0x9000, scoped, tag = 'internal scratch']
  %s0 = inlined_call_operand.hbm [shape: f32[36,512], index: 0, kind: input, shape index: {}]
  %s1 = inlined_call_operand.vmem [shape: f32[16,36], index: 1, kind: input, shape index: {}]
  %s2 = inlined_call_operand.vmem [shape: f32[16,1], index: 2, kind: input, shape index: {}]
  %s3 = inlined_call_operand.hbm [shape: f32[8,512], index: 3, kind: output, shape index: {}]
  %s4 = sld [smem:[#allocation0]]
  $region26: #{tpu_custom_call.1} parent=0
    _
  %s6 = ssub.s32 1, %s4
  %s7 = scalar_select 0, %s6, %s4
  $region1: #{tpu_custom_call.1} parent=0
    #allocation2 [shape = 'u8[81920]{0}', space=vmem, size = 0x14000, scoped, tag = 'input window, operand 0, single buffered']
    #allocation3 [shape = 's32[1]{0}', space=sflag, size = 0x4, scoped, tag = 'scoped memory for tpu_custom_call.1']
    #allocation4 [shape = 's32[1]{0}', space=sflag, size = 0x4, scoped, tag = 'scoped memory for tpu_custom_call.1']
    #allocation5 [shape = 'u8[16384]{0}', space=vmem, size = 0x4000, scoped, tag = 'output window, operand 0, single buffered']
    %8 = vsyncpa [#allocation3], 0
    %9 = vsyncpa [#allocation4], 0
    // Predicated region
    $region2: #{tpu_custom_call.1} parent=1 // pred_check
      _
    $region3: #{tpu_custom_call.1} parent=1 // pred_check_branch
      %11 = sbr.rel (0) target = $region5
    $region4: #{tpu_custom_call.1} parent=1 // pred_region
      %13 = vsyncadd [#allocation3], 0
      %s14 = sshll.u32 %s0, 4
      %s15 = int_to_ptr.hbm [resolvable:$true] %s14
      %s16 = sshll.u32 [#allocation2], 4
      %s17 = int_to_ptr.vmem [resolvable:$true] %s16
      %22 = dma.hbm_to_vmem [thread:$0]  %s15, 2560, %s17, [#allocation3], 512, 512, 32
    $region5: #{tpu_custom_call.1} parent=1 // pred_fallthru
      _
    // Predicated region
    $region6: #{tpu_custom_call.1} parent=1 // pred_check
      _
    $region7: #{tpu_custom_call.1} parent=1 // pred_check_branch
      %24 = sbr.rel (0) target = $region9
    $region8: #{tpu_custom_call.1} parent=1 // pred_region
      _
    $region9: #{tpu_custom_call.1} parent=1 // pred_fallthru
      _
    // Predicated region
    $region10: #{tpu_custom_call.1} parent=1 // pred_check
      _
    $region11: #{tpu_custom_call.1} parent=1 // pred_check_branch
      %26 = sbr.rel (0) target = $region13
    $region12: #{tpu_custom_call.1} parent=1 // pred_region
      _
    $region13: #{tpu_custom_call.1} parent=1 // pred_fallthru
      _
    // Predicated region
    $region14: #{tpu_custom_call.1} parent=1 // pred_check
      _
    $region15: #{tpu_custom_call.1} parent=1 // pred_check_branch
      %28 = sbr.rel (0) target = $region17
    $region16: #{tpu_custom_call.1} parent=1 // pred_region
      %30 = dma.done [#allocation3], 2560
    $region17: #{tpu_custom_call.1} parent=1 // pred_fallthru
      _
    %v31 = vld [vmem:[%s1] sm:$0xff]
    %v32 = vld [vmem:[%s1 + $0x8] sm:$0xff]
    %v33 = vld [vmem:[#allocation2] sm:$0xff]
    %v34 = vld [vmem:[#allocation2 + $0x8] sm:$0xff]
    %v35 = vld [vmem:[#allocation2 + $0x10] sm:$0xff]
    %v36 = vld [vmem:[#allocation2 + $0x18] sm:$0xff]
    %v37 = vld [vmem:[#allocation2 + $0x20] sm:$0xff]
    %v38 = vld [vmem:[#allocation2 + $0x28] sm:$0xff]
    %v39 = vld [vmem:[#allocation2 + $0x30] sm:$0xff]
    %v40 = vld [vmem:[#allocation2 + $0x38] sm:$0xff]
    %v41 = vld [vmem:[#allocation2 + $0x40] sm:$0xff]
    %v42 = vld [vmem:[#allocation2 + $0x48] sm:$0xff]
    %v43 = vld [vmem:[#allocation2 + $0x50] sm:$0xff]
    %v44 = vld [vmem:[#allocation2 + $0x58] sm:$0xff]
    %v45 = vld [vmem:[#allocation2 + $0x60] sm:$0xff]
    %v46 = vld [vmem:[#allocation2 + $0x68] sm:$0xff]
    %v47 = vld [vmem:[#allocation2 + $0x70] sm:$0xff]
    %v48 = vld [vmem:[#allocation2 + $0x78] sm:$0xff]
    %v49 = vld [vmem:[#allocation2 + $0x80] sm:$0xf]
    %v50 = vld [vmem:[#allocation2 + $0x88] sm:$0xf]
    %v51 = vld [vmem:[#allocation2 + $0x90] sm:$0xf]
    %v52 = vld [vmem:[#allocation2 + $0x98] sm:$0xf]
    %v53 = vld [vmem:[%s2] sm:$0xff]
    %v54 = vld [vmem:[%s2 + $0x8] sm:$0xff]
    %56 = vset.pattern.permute.xlu0 0
    %57 = vperm.xlu0 %56, %v53
    %v58 = vpop.permute.xlu0 %57
    %61 = vset.pattern.permute.xlu0 0
    %62 = vperm.xlu0 %61, %v54
    %v63 = vpop.permute.xlu0 %62
    %vm65 = vcmask 293888
    %v67 = vsel %vm65, %v31, 0
    %v70 = vsel %vm65, %v32, 0
    %vm72 = vcmask 1043456
    %v74 = vsel %vm72, %v49, 0
    %v77 = vsel %vm72, %v50, 0
    %v80 = vsel %vm72, %v51, 0
    %v83 = vsel %vm72, %v52, 0
    %85 = vmatpush.msra.mxu0 0.0
    %86 = vmatpush.msra.mxu0 0.0
    %87 = vmatpush.msra.mxu0 0.0
    %88 = vmatpush.msra.mxu0 0.0
    %89 = vmatpush.msra.mxu0 0.0
    %90 = vmatpush.msra.mxu0 0.0
    %91 = vmatpush.msra.mxu0 0.0
    %92 = vmatpush.msra.mxu0 0.0
    %93 = vmatpush.msra.mxu0 0.0
    %94 = vmatpush.msra.mxu0 0.0
    %95 = vmatpush.msra.mxu0 0.0
    %96 = vmatpush.msra.mxu0 %v74
    %97 = vmatpush.msra.mxu0 %v45
    %98 = vmatpush.msra.mxu0 %v41
    %99 = vmatpush.msra.mxu0 %v37
    %100 = vmatpush.msra.mxu0 %v33
    %101 = vmatmul.f32.gmra.mxu0 %v67
    %v102 = vpop.f32.mrf.mxu0
    %v103 = vadd.f32 %v58, %v102
    %104 = vmatmul.f32.gmra.mxu0 %v70
    %v105 = vpop.f32.mrf.mxu0
    %v106 = vadd.f32 %v63, %v105
    %107 = vdwg.mxu0
    %108 = vmatpush.msra.mxu0 0.0
    %109 = vmatpush.msra.mxu0 0.0
    %110 = vmatpush.msra.mxu0 0.0
    %111 = vmatpush.msra.mxu0 0.0
    %112 = vmatpush.msra.mxu0 0.0
    %113 = vmatpush.msra.mxu0 0.0
    %114 = vmatpush.msra.mxu0 0.0
    %115 = vmatpush.msra.mxu0 0.0
    %116 = vmatpush.msra.mxu0 0.0
    %117 = vmatpush.msra.mxu0 0.0
    %118 = vmatpush.msra.mxu0 0.0
    %119 = vmatpush.msra.mxu0 %v77
    %120 = vmatpush.msra.mxu0 %v46
    %121 = vmatpush.msra.mxu0 %v42
    %122 = vmatpush.msra.mxu0 %v38
    %123 = vmatpush.msra.mxu0 %v34
    %124 = vmatmul.f32.gmra.mxu0 %v67
    %v125 = vpop.f32.mrf.mxu0
    %v126 = vadd.f32 %v58, %v125
    %127 = vmatmul.f32.gmra.mxu0 %v70
    %v128 = vpop.f32.mrf.mxu0
    %v129 = vadd.f32 %v63, %v128
    %130 = vdwg.mxu0
    %131 = vmatpush.msra.mxu0 0.0
    %132 = vmatpush.msra.mxu0 0.0
    %133 = vmatpush.msra.mxu0 0.0
    %134 = vmatpush.msra.mxu0 0.0
    %135 = vmatpush.msra.mxu0 0.0
    %136 = vmatpush.msra.mxu0 0.0
    %137 = vmatpush.msra.mxu0 0.0
    %138 = vmatpush.msra.mxu0 0.0
    %139 = vmatpush.msra.mxu0 0.0
    %140 = vmatpush.msra.mxu0 0.0
    %141 = vmatpush.msra.mxu0 0.0
    %142 = vmatpush.msra.mxu0 %v80
    %143 = vmatpush.msra.mxu0 %v47
    %144 = vmatpush.msra.mxu0 %v43
    %145 = vmatpush.msra.mxu0 %v39
    %146 = vmatpush.msra.mxu0 %v35
    %147 = vmatmul.f32.gmra.mxu0 %v67
    %v148 = vpop.f32.mrf.mxu0
    %v149 = vadd.f32 %v58, %v148
    %150 = vmatmul.f32.gmra.mxu0 %v70
    %v151 = vpop.f32.mrf.mxu0
    %v152 = vadd.f32 %v63, %v151
    %153 = vdwg.mxu0
    %154 = vmatpush.msra.mxu0 0.0
    %155 = vmatpush.msra.mxu0 0.0
    %156 = vmatpush.msra.mxu0 0.0
    %157 = vmatpush.msra.mxu0 0.0
    %158 = vmatpush.msra.mxu0 0.0
    %159 = vmatpush.msra.mxu0 0.0
    %160 = vmatpush.msra.mxu0 0.0
    %161 = vmatpush.msra.mxu0 0.0
    %162 = vmatpush.msra.mxu0 0.0
    %163 = vmatpush.msra.mxu0 0.0
    %164 = vmatpush.msra.mxu0 0.0
    %165 = vmatpush.msra.mxu0 %v83
    %166 = vmatpush.msra.mxu0 %v48
    %167 = vmatpush.msra.mxu0 %v44
    %168 = vmatpush.msra.mxu0 %v40
    %169 = vmatpush.msra.mxu0 %v36
    %170 = vmatmul.f32.gmra.mxu0 %v67
    %v171 = vpop.f32.mrf.mxu0
    %v172 = vadd.f32 %v58, %v171
    %173 = vmatmul.f32.gmra.mxu0 %v70
    %v174 = vpop.f32.mrf.mxu0
    %v175 = vadd.f32 %v63, %v174
    %176 = vdwg.mxu0
    %v177 = vmax.f32 %v103, 0.0
    %v178 = vmax.f32 %v126, 0.0
    %v179 = vmax.f32 %v149, 0.0
    %v180 = vmax.f32 %v172, 0.0
    %v181 = vadd.f32 %v177, %v106
    %v182 = vadd.f32 %v178, %v129
    %v183 = vadd.f32 %v179, %v152
    %v184 = vadd.f32 %v180, %v175
    %v185 = vmax.f32 %v181, 0.0
    %v186 = vmax.f32 %v182, 0.0
    %v187 = vmax.f32 %v183, 0.0
    %v188 = vmax.f32 %v184, 0.0
    %189 = vst [vmem:[#allocation5] sm:$0xff] %v185
    %190 = vst [vmem:[#allocation5 + $0x8] sm:$0xff] %v186
    %191 = vst [vmem:[#allocation5 + $0x10] sm:$0xff] %v187
    %192 = vst [vmem:[#allocation5 + $0x18] sm:$0xff] %v188
    // Predicated region
    $region18: #{tpu_custom_call.1} parent=1 // pred_check
      _
    $region19: #{tpu_custom_call.1} parent=1 // pred_check_branch
      %194 = sbr.rel (0) target = $region21
    $region20: #{tpu_custom_call.1} parent=1 // pred_region
      %196 = vsyncadd [#allocation4], 0
      %s198 = sshll.u32 [#allocation5], 4
      %s199 = int_to_ptr.vmem [resolvable:$true] %s198
      %s200 = sshll.u32 %s3, 4
      %s201 = int_to_ptr.hbm [resolvable:$true] %s200
      %203 = dma.vmem_to_hbm [thread:$0]  %s199, 512, %s201, [#allocation4]
    $region21: #{tpu_custom_call.1} parent=1 // pred_fallthru
      _
    // Predicated region
    $region22: #{tpu_custom_call.1} parent=1 // pred_check
      _
    $region23: #{tpu_custom_call.1} parent=1 // pred_check_branch
      %205 = sbr.rel (0) target = $region25
    $region24: #{tpu_custom_call.1} parent=1 // pred_region
      %207 = dma.done [#allocation4], 512
    $region25: #{tpu_custom_call.1} parent=1 // pred_fallthru
      _
    %208 = vsyncpa [#allocation3], 1
    %209 = vsyncpa [#allocation4], 1

</llo_original>
